<compile_context>
chip_gen: v5e
topology: v5e:2x2
jax: 0.10.0
libtpu: 0.0.40
codegen_flags: <defaults>
</compile_context>

<pallas_src>
import functools

import numpy as np
import jax
import jax.numpy as jnp
from jax.experimental import pallas as pl
from jax.experimental.pallas import tpu as pltpu


def _round_up(x: int, m: int) -> int:
    return (x + m - 1) // m * m


def _bilinear_weight_matrix(out_size: int, in_size: int) -> np.ndarray:
    """(out_size, in_size) interpolation matrix for bilinear resize with
    half-pixel centers, align_corners=False, antialias=False (kornia/PyTorch
    default).  Host-side numpy: one-time setup, not kernel work."""
    dst = np.arange(out_size, dtype=np.float64)
    scale = in_size / out_size
    src = np.clip((dst + 0.5) * scale - 0.5, 0.0, in_size - 1)
    lo = np.floor(src)
    hi = np.minimum(lo + 1.0, in_size - 1)
    frac = src - lo
    cols = np.arange(in_size, dtype=np.float64)[None, :]
    w = ((cols == lo[:, None]) * (1.0 - frac)[:, None]
         + (cols == hi[:, None]) * frac[:, None])
    return w.astype(np.float32)


def _combined_weights(h_out: int, w_out: int, h_in: int, w_in: int) -> np.ndarray:
    """K[h*W_in + w, i*W_out + j] = Wh[i, h] * Ww[j, w] / 255 (1/255 folded in)."""
    wh = _bilinear_weight_matrix(h_out, h_in)          # (H_out, H_in)
    ww = _bilinear_weight_matrix(w_out, w_in)          # (W_out, W_in)
    k = np.einsum("ih,jw->hwij", wh, ww).reshape(h_in * w_in, h_out * w_out)
    return (k * (1.0 / 255.0)).astype(np.float32)


def _preprocess_kernel(x_ref, k_ref, o_ref):
    # x_ref: (TM, H_in*W_in) uint8  -- rows are (image, channel) planes, lane-dense
    # k_ref: (H_in*W_in, H_out*W_out) bf16/f32 combined resize weights (/255 folded)
    # o_ref: (TM, H_out*W_out) f32  -- lane/sublane-dense output slab
    x = x_ref[...].astype(k_ref.dtype)   # VPU cast of the VMEM tile; u8->bf16 is exact
    # Contraction-last MXU matmul, f32 accumulator.
    o_ref[...] = jnp.dot(x, k_ref[...], preferred_element_type=jnp.float32)


@functools.partial(jax.jit, static_argnames=("input_size", "compute_dtype"))
def preprocess(x: jnp.ndarray, input_size: int = 32,
               compute_dtype=jnp.bfloat16) -> jnp.ndarray:
    """JAX/Pallas equivalent of Preprocess.forward.

    Accepts a single (H, W, C) uint8 image (module semantics, keepdim=True) or
    a batch (N, H, W, C); returns (C, S, S) / (N, C, S, S) float32 in [0, 1].
    """
    single = x.ndim == 3
    if single:
        x = x[None]
    n, h_in, w_in, c = x.shape
    hw_in = h_in * w_in
    hw_out = input_size * input_size
    m = n * c

    # Lane-dense, contraction-last LHS: cheap uint8 NHWC -> (N*C, H*W) in the
    # wrapper (tiny uint8 transpose, no 4x f32 HBM inflation).
    x2d = jnp.transpose(x, (0, 3, 1, 2)).reshape(m, hw_in)

    # Row block: multiple of 32 (uint8 sublane packing) capped at 256 (MXU M
    # on v6e/v7x; 2 passes on v5e's 128-row MXU).
    tm = min(256, _round_up(m, 32))
    m_pad = _round_up(m, tm)
    if m_pad != m:
        x2d = jnp.pad(x2d, ((0, m_pad - m), (0, 0)))

    # TODO(synk): the dense Kronecker K is O(hw_in*hw_out) and baked in as a
    # trace-time constant; above ~64x64 inputs switch to the separable
    # (rows-then-cols) two-matmul formulation and build weights outside jit.
    k = jnp.asarray(
        _combined_weights(input_size, input_size, h_in, w_in)).astype(compute_dtype)

    # VMEM budget: K single-buffered + double-buffered input/output row blocks.
    k_bytes = hw_in * hw_out * np.dtype(compute_dtype).itemsize
    vmem_need = k_bytes + 2 * tm * hw_in + 2 * tm * hw_out * 4
    cp = dict(dimension_semantics=("parallel",))   # row blocks are independent
    if vmem_need > (16 << 20):                     # re-budget (v7x: 64 MiB physical)
        cp["vmem_limit_bytes"] = min(int(vmem_need * 1.25) + (4 << 20), 100 << 20)

    out_flat = pl.pallas_call(
        _preprocess_kernel,
        out_shape=jax.ShapeDtypeStruct((m_pad, hw_out), jnp.float32),
        grid_spec=pltpu.PrefetchScalarGridSpec(
            num_scalar_prefetch=0,
            grid=(m_pad // tm,),
            in_specs=[
                pl.BlockSpec((tm, hw_in), lambda i: (i, 0)),
                # Constant index_map + single buffer -> K is DMA'd once and
                # stays VMEM-resident without a second pipeline buffer.
                pl.BlockSpec((hw_in, hw_out), lambda i: (0, 0),
                             pipeline_mode=pl.Buffered(1)),
            ],
            out_specs=pl.BlockSpec((tm, hw_out), lambda i: (i, 0)),
        ),
        compiler_params=pltpu.CompilerParams(**cp),
    )(x2d, k)

    out = out_flat[:m].reshape(n, c, input_size, input_size)   # contiguous: free
    return out[0] if single else out


if __name__ == "__main__":
    key = jax.random.PRNGKey(0)
    N, H, W, C = 4, 16, 16, 3
    S = 32
    x = jax.random.randint(key, (N, H, W, C), 0, 256, dtype=jnp.int32).astype(jnp.uint8)

    # Pure-JAX reference: same half-pixel bilinear weights applied separably
    # to the normalized image (matches kornia bilinear, antialias=False).
    wh = jnp.asarray(_bilinear_weight_matrix(S, H))
    ww = jnp.asarray(_bilinear_weight_matrix(S, W))
    ref = jnp.einsum("ih,nhwc,jw->ncij", wh, x.astype(jnp.float32) / 255.0, ww)

    # Default path: bf16 operands, f32 accumulate/output (~1e-3 abs error).
    y = jax.block_until_ready(preprocess(x, input_size=S))
    assert y.shape == (N, C, S, S), y.shape
    assert y.dtype == jnp.float32, y.dtype
    assert jnp.allclose(y, ref, atol=1e-2), float(jnp.max(jnp.abs(y - ref)))
    assert float(jnp.min(y)) >= 0.0 and float(jnp.max(y)) <= 1.0 + 1e-2

    # f32 operand path: bit-accuracy check against the reference.
    y32 = jax.block_until_ready(preprocess(x, input_size=S, compute_dtype=jnp.float32))
    assert jnp.allclose(y32, ref, atol=1e-5, rtol=1e-5), \
        float(jnp.max(jnp.abs(y32 - ref)))

    # Single-image path matches the module's keepdim=True semantics.
    y1 = jax.block_until_ready(preprocess(x[0], input_size=S))
    assert y1.shape == (C, S, S), y1.shape
    assert jnp.allclose(y1, ref[0], atol=1e-2)

    print("KERNEL_OK")
</pallas_src>

<mosaic_0001>
module attributes {stable_mosaic.version = 11 : i64} {
  func.func @_preprocess_kernel(%arg0: i32, %arg1: memref<32x256xi8, #tpu.memory_space<vmem>>, %arg2: memref<256x1024xbf16, #tpu.memory_space<vmem>>, %arg3: memref<32x1024xf32, #tpu.memory_space<vmem>>) attributes {dimension_semantics = [#tpu.dimension_semantics<parallel>], iteration_bounds = array<i64: 1>, scalar_prefetch = 0 : i64, scratch_operands = 0 : i64, tpu.core_type = #tpu.core_type<tc>, window_params = [{transform_indices = @transform_0, window_bounds = array<i64: 32, 256>}, {pipeline_mode = #tpu.pipeline_mode<synchronous>, transform_indices = @transform_1, window_bounds = array<i64: 256, 1024>}, {transform_indices = @transform_2, window_bounds = array<i64: 32, 1024>}]} {
    %c0 = arith.constant 0 : index
    %c0_0 = arith.constant 0 : index
    %0 = vector.load %arg1[%c0, %c0_0] : memref<32x256xi8, #tpu.memory_space<vmem>>, vector<32x256xi8>
    %1 = arith.uitofp %0 : vector<32x256xi8> to vector<32x256xbf16>
    %c0_1 = arith.constant 0 : index
    %c0_2 = arith.constant 0 : index
    %2 = vector.load %arg2[%c0_1, %c0_2] : memref<256x1024xbf16, #tpu.memory_space<vmem>>, vector<256x1024xbf16>
    %cst = arith.constant dense<0.000000e+00> : vector<32x1024xf32>
    %3 = tpu.matmul %1, %2, %cst {dimension_numbers = #tpu.dot_dimension_numbers<[1], [0], [0], [1], [0, 0, 1, 1], [], []>} : vector<32x256xbf16>, vector<256x1024xbf16>, vector<32x1024xf32> -> vector<32x1024xf32>
    %c0_3 = arith.constant 0 : index
    %c0_4 = arith.constant 0 : index
    %4 = vector.load %arg3[%c0_3, %c0_4] : memref<32x1024xf32, #tpu.memory_space<vmem>>, vector<32x1024xf32>
    tpu.vector_store %arg3[%c0_3, %c0_4], %3 {strides = array<i32>} : memref<32x1024xf32, #tpu.memory_space<vmem>>, vector<32x1024xf32>,
    return
  }
  func.func @transform_0(%arg0: i32) -> (i32, i32) {
    %c0_i32 = arith.constant 0 : i32
    %c0_i32_0 = arith.constant 0 : i32
    return %arg0, %c0_i32 : i32, i32
  }
  func.func @transform_1(%arg0: i32) -> (i32, i32) {
    %c0_i32 = arith.constant 0 : i32
    %c0_i32_0 = arith.constant 0 : i32
    %c0_i32_1 = arith.constant 0 : i32
    return %c0_i32, %c0_i32_0 : i32, i32
  }
  func.func @transform_2(%arg0: i32) -> (i32, i32) {
    %c0_i32 = arith.constant 0 : i32
    %c0_i32_0 = arith.constant 0 : i32
    return %arg0, %c0_i32 : i32, i32
  }
}

</mosaic_0001>

<llo_original>
// kernel: preprocess.1
$region0: #{preprocess.1}
  #allocation0 [shape = 'u32[]', space=smem, size = 0x4, offset = 0x4, fixed_abs, tag = 'smem constant byte address 0x4 - core index']
  #allocation1 [shape = 'u32[72,128]{1,0:T(1,128)}', space=vmem, size = 0x9000, scoped, tag = 'internal scratch']
  %s0 = inlined_call_operand.vmem [shape: u8[32,256], index: 0, kind: input, shape index: {}]
  %s1 = inlined_call_operand.hbm [shape: bf16[256,1024], index: 1, kind: input, shape index: {}]
  %s2 = inlined_call_operand.vmem [shape: f32[32,1024], index: 2, kind: output, shape index: {}]
  %s3 = sld [smem:[#allocation0]]
  $region22: #{preprocess.1} parent=0
    _
  %s5 = ssub.s32 1, %s3
  %s6 = scalar_select 0, %s5, %s3
  $region1: #{preprocess.1} parent=0
    #allocation2 [shape = 'u8[524288]{0}', space=vmem, size = 0x80000, scoped, tag = 'input window, operand 1, single buffered']
    #allocation3 [shape = 's32[1]{0}', space=sflag, size = 0x4, scoped, tag = 'scoped memory for preprocess.1']
    %7 = vsyncpa [#allocation3], 0
    // Predicated region
    $region2: #{preprocess.1} parent=1 // pred_check
      _
    $region3: #{preprocess.1} parent=1 // pred_check_branch
      %9 = sbr.rel (0) target = $region5
    $region4: #{preprocess.1} parent=1 // pred_region
      _
    $region5: #{preprocess.1} parent=1 // pred_fallthru
      _
    // Predicated region
    $region6: #{preprocess.1} parent=1 // pred_check
      _
    $region7: #{preprocess.1} parent=1 // pred_check_branch
      %11 = sbr.rel (0) target = $region9
    $region8: #{preprocess.1} parent=1 // pred_region
      %13 = vsyncadd [#allocation3], 0
      %s14 = sshll.u32 %s1, 4
      %s15 = int_to_ptr.hbm [resolvable:$true] %s14
      %s16 = sshll.u32 [#allocation2], 4
      %s17 = int_to_ptr.vmem [resolvable:$true] %s16
      %22 = dma.hbm_to_vmem [thread:$0]  %s15, 16384, %s17, [#allocation3], 512, 512, 32
    $region9: #{preprocess.1} parent=1 // pred_fallthru
      _
    // Predicated region
    $region10: #{preprocess.1} parent=1 // pred_check
      _
    $region11: #{preprocess.1} parent=1 // pred_check_branch
      %24 = sbr.rel (0) target = $region13
    $region12: #{preprocess.1} parent=1 // pred_region
      %26 = dma.done [#allocation3], 16384
    $region13: #{preprocess.1} parent=1 // pred_fallthru
      _
    %v27 = vld [vmem:[%s0] sm:$0xff]
    %v28 = vld [vmem:[%s0 + $0x8] sm:$0xff]
    %v29 = vunpack.c.0.s8 %v27
    %v30 = vunpack.c.0.s8 %v28
    %v31 = vunpack.c.1.s8 %v27
    %v32 = vunpack.c.1.s8 %v28
    %v33 = vunpack.c.2.s8 %v27
    %v34 = vunpack.c.2.s8 %v28
    %v35 = vunpack.c.3.s8 %v27
    %v36 = vunpack.c.3.s8 %v28
    %v37 = vand.u32 %v29, 255
    %v38 = vand.u32 %v30, 255
    %v39 = vand.u32 %v31, 255
    %v40 = vand.u32 %v32, 255
    %v41 = vand.u32 %v33, 255
    %v42 = vand.u32 %v34, 255
    %v43 = vand.u32 %v35, 255
    %v44 = vand.u32 %v36, 255
    %v45 = vcvt.s32.f32 %v37
    %v46 = vcvt.s32.f32 %v38
    %v47 = vcvt.s32.f32 %v39
    %v48 = vcvt.s32.f32 %v40
    %v49 = vcvt.s32.f32 %v41
    %v50 = vcvt.s32.f32 %v42
    %v51 = vcvt.s32.f32 %v43
    %v52 = vcvt.s32.f32 %v44
    %v53 = vpack.c.bf16 %v47, %v45
    %v54 = vpack.c.bf16 %v48, %v46
    %v55 = vpack.c.bf16 %v51, %v49
    %v56 = vpack.c.bf16 %v52, %v50
    %v57 = vld [vmem:[#allocation2] sm:$0xff]
    %v58 = vld [vmem:[#allocation2 + $0x8] sm:$0xff]
    %v59 = vld [vmem:[#allocation2 + $0x10] sm:$0xff]
    %v60 = vld [vmem:[#allocation2 + $0x18] sm:$0xff]
    %v61 = vld [vmem:[#allocation2 + $0x20] sm:$0xff]
    %v62 = vld [vmem:[#allocation2 + $0x28] sm:$0xff]
    %v63 = vld [vmem:[#allocation2 + $0x30] sm:$0xff]
    %v64 = vld [vmem:[#allocation2 + $0x38] sm:$0xff]
    %v65 = vld [vmem:[#allocation2 + $0x40] sm:$0xff]
    %v66 = vld [vmem:[#allocation2 + $0x48] sm:$0xff]
    %v67 = vld [vmem:[#allocation2 + $0x50] sm:$0xff]
    %v68 = vld [vmem:[#allocation2 + $0x58] sm:$0xff]
    %v69 = vld [vmem:[#allocation2 + $0x60] sm:$0xff]
    %v70 = vld [vmem:[#allocation2 + $0x68] sm:$0xff]
    %v71 = vld [vmem:[#allocation2 + $0x70] sm:$0xff]
    %v72 = vld [vmem:[#allocation2 + $0x78] sm:$0xff]
    %v73 = vld [vmem:[#allocation2 + $0x80] sm:$0xff]
    %v74 = vld [vmem:[#allocation2 + $0x88] sm:$0xff]
    %v75 = vld [vmem:[#allocation2 + $0x90] sm:$0xff]
    %v76 = vld [vmem:[#allocation2 + $0x98] sm:$0xff]
    %v77 = vld [vmem:[#allocation2 + $0xa0] sm:$0xff]
    %v78 = vld [vmem:[#allocation2 + $0xa8] sm:$0xff]
    %v79 = vld [vmem:[#allocation2 + $0xb0] sm:$0xff]
    %v80 = vld [vmem:[#allocation2 + $0xb8] sm:$0xff]
    %v81 = vld [vmem:[#allocation2 + $0xc0] sm:$0xff]
    %v82 = vld [vmem:[#allocation2 + $0xc8] sm:$0xff]
    %v83 = vld [vmem:[#allocation2 + $0xd0] sm:$0xff]
    %v84 = vld [vmem:[#allocation2 + $0xd8] sm:$0xff]
    %v85 = vld [vmem:[#allocation2 + $0xe0] sm:$0xff]
    %v86 = vld [vmem:[#allocation2 + $0xe8] sm:$0xff]
    %v87 = vld [vmem:[#allocation2 + $0xf0] sm:$0xff]
    %v88 = vld [vmem:[#allocation2 + $0xf8] sm:$0xff]
    %v89 = vld [vmem:[#allocation2 + $0x100] sm:$0xff]
    %v90 = vld [vmem:[#allocation2 + $0x108] sm:$0xff]
    %v91 = vld [vmem:[#allocation2 + $0x110] sm:$0xff]
    %v92 = vld [vmem:[#allocation2 + $0x118] sm:$0xff]
    %v93 = vld [vmem:[#allocation2 + $0x120] sm:$0xff]
    %v94 = vld [vmem:[#allocation2 + $0x128] sm:$0xff]
    %v95 = vld [vmem:[#allocation2 + $0x130] sm:$0xff]
    %v96 = vld [vmem:[#allocation2 + $0x138] sm:$0xff]
    %v97 = vld [vmem:[#allocation2 + $0x140] sm:$0xff]
    %v98 = vld [vmem:[#allocation2 + $0x148] sm:$0xff]
    %v99 = vld [vmem:[#allocation2 + $0x150] sm:$0xff]
    %v100 = vld [vmem:[#allocation2 + $0x158] sm:$0xff]
    %v101 = vld [vmem:[#allocation2 + $0x160] sm:$0xff]
    %v102 = vld [vmem:[#allocation2 + $0x168] sm:$0xff]
    %v103 = vld [vmem:[#allocation2 + $0x170] sm:$0xff]
    %v104 = vld [vmem:[#allocation2 + $0x178] sm:$0xff]
    %v105 = vld [vmem:[#allocation2 + $0x180] sm:$0xff]
    %v106 = vld [vmem:[#allocation2 + $0x188] sm:$0xff]
    %v107 = vld [vmem:[#allocation2 + $0x190] sm:$0xff]
    %v108 = vld [vmem:[#allocation2 + $0x198] sm:$0xff]
    %v109 = vld [vmem:[#allocation2 + $0x1a0] sm:$0xff]
    %v110 = vld [vmem:[#allocation2 + $0x1a8] sm:$0xff]
    %v111 = vld [vmem:[#allocation2 + $0x1b0] sm:$0xff]
    %v112 = vld [vmem:[#allocation2 + $0x1b8] sm:$0xff]
    %v113 = vld [vmem:[#allocation2 + $0x1c0] sm:$0xff]
    %v114 = vld [vmem:[#allocation2 + $0x1c8] sm:$0xff]
    %v115 = vld [vmem:[#allocation2 + $0x1d0] sm:$0xff]
    %v116 = vld [vmem:[#allocation2 + $0x1d8] sm:$0xff]
    %v117 = vld [vmem:[#allocation2 + $0x1e0] sm:$0xff]
    %v118 = vld [vmem:[#allocation2 + $0x1e8] sm:$0xff]
    %v119 = vld [vmem:[#allocation2 + $0x1f0] sm:$0xff]
    %v120 = vld [vmem:[#allocation2 + $0x1f8] sm:$0xff]
    %v121 = vld [vmem:[#allocation2 + $0x200] sm:$0xff]
    %v122 = vld [vmem:[#allocation2 + $0x208] sm:$0xff]
    %v123 = vld [vmem:[#allocation2 + $0x210] sm:$0xff]
    %v124 = vld [vmem:[#allocation2 + $0x218] sm:$0xff]
    %v125 = vld [vmem:[#allocation2 + $0x220] sm:$0xff]
    %v126 = vld [vmem:[#allocation2 + $0x228] sm:$0xff]
    %v127 = vld [vmem:[#allocation2 + $0x230] sm:$0xff]
    %v128 = vld [vmem:[#allocation2 + $0x238] sm:$0xff]
    %v129 = vld [vmem:[#allocation2 + $0x240] sm:$0xff]
    %v130 = vld [vmem:[#allocation2 + $0x248] sm:$0xff]
    %v131 = vld [vmem:[#allocation2 + $0x250] sm:$0xff]
    %v132 = vld [vmem:[#allocation2 + $0x258] sm:$0xff]
    %v133 = vld [vmem:[#allocation2 + $0x260] sm:$0xff]
    %v134 = vld [vmem:[#allocation2 + $0x268] sm:$0xff]
    %v135 = vld [vmem:[#allocation2 + $0x270] sm:$0xff]
    %v136 = vld [vmem:[#allocation2 + $0x278] sm:$0xff]
    %v137 = vld [vmem:[#allocation2 + $0x280] sm:$0xff]
    %v138 = vld [vmem:[#allocation2 + $0x288] sm:$0xff]
    %v139 = vld [vmem:[#allocation2 + $0x290] sm:$0xff]
    %v140 = vld [vmem:[#allocation2 + $0x298] sm:$0xff]
    %v141 = vld [vmem:[#allocation2 + $0x2a0] sm:$0xff]
    %v142 = vld [vmem:[#allocation2 + $0x2a8] sm:$0xff]
    %v143 = vld [vmem:[#allocation2 + $0x2b0] sm:$0xff]
    %v144 = vld [vmem:[#allocation2 + $0x2b8] sm:$0xff]
    %v145 = vld [vmem:[#allocation2 + $0x2c0] sm:$0xff]
    %v146 = vld [vmem:[#allocation2 + $0x2c8] sm:$0xff]
    %v147 = vld [vmem:[#allocation2 + $0x2d0] sm:$0xff]
    %v148 = vld [vmem:[#allocation2 + $0x2d8] sm:$0xff]
    %v149 = vld [vmem:[#allocation2 + $0x2e0] sm:$0xff]
    %v150 = vld [vmem:[#allocation2 + $0x2e8] sm:$0xff]
    %v151 = vld [vmem:[#allocation2 + $0x2f0] sm:$0xff]
    %v152 = vld [vmem:[#allocation2 + $0x2f8] sm:$0xff]
    %v153 = vld [vmem:[#allocation2 + $0x300] sm:$0xff]
    %v154 = vld [vmem:[#allocation2 + $0x308] sm:$0xff]
    %v155 = vld [vmem:[#allocation2 + $0x310] sm:$0xff]
    %v156 = vld [vmem:[#allocation2 + $0x318] sm:$0xff]
    %v157 = vld [vmem:[#allocation2 + $0x320] sm:$0xff]
    %v158 = vld [vmem:[#allocation2 + $0x328] sm:$0xff]
    %v159 = vld [vmem:[#allocation2 + $0x330] sm:$0xff]
    %v160 = vld [vmem:[#allocation2 + $0x338] sm:$0xff]
    %v161 = vld [vmem:[#allocation2 + $0x340] sm:$0xff]
    %v162 = vld [vmem:[#allocation2 + $0x348] sm:$0xff]
    %v163 = vld [vmem:[#allocation2 + $0x350] sm:$0xff]
    %v164 = vld [vmem:[#allocation2 + $0x358] sm:$0xff]
    %v165 = vld [vmem:[#allocation2 + $0x360] sm:$0xff]
    %v166 = vld [vmem:[#allocation2 + $0x368] sm:$0xff]
    %v167 = vld [vmem:[#allocation2 + $0x370] sm:$0xff]
    %v168 = vld [vmem:[#allocation2 + $0x378] sm:$0xff]
    %v169 = vld [vmem:[#allocation2 + $0x380] sm:$0xff]
    %v170 = vld [vmem:[#allocation2 + $0x388] sm:$0xff]
    %v171 = vld [vmem:[#allocation2 + $0x390] sm:$0xff]
    %v172 = vld [vmem:[#allocation2 + $0x398] sm:$0xff]
    %v173 = vld [vmem:[#allocation2 + $0x3a0] sm:$0xff]
    %v174 = vld [vmem:[#allocation2 + $0x3a8] sm:$0xff]
    %v175 = vld [vmem:[#allocation2 + $0x3b0] sm:$0xff]
    %v176 = vld [vmem:[#allocation2 + $0x3b8] sm:$0xff]
    %v177 = vld [vmem:[#allocation2 + $0x3c0] sm:$0xff]
    %v178 = vld [vmem:[#allocation2 + $0x3c8] sm:$0xff]
    %v179 = vld [vmem:[#allocation2 + $0x3d0] sm:$0xff]
    %v180 = vld [vmem:[#allocation2 + $0x3d8] sm:$0xff]
    %v181 = vld [vmem:[#allocation2 + $0x3e0] sm:$0xff]
    %v182 = vld [vmem:[#allocation2 + $0x3e8] sm:$0xff]
    %v183 = vld [vmem:[#allocation2 + $0x3f0] sm:$0xff]
    %v184 = vld [vmem:[#allocation2 + $0x3f8] sm:$0xff]
    %v313 = vunpack.c.l.b16 %v57
    %v314 = vunpack.c.h.b16 %v57
    %v315 = vunpack.c.l.b16 %v58
    %v316 = vunpack.c.h.b16 %v58
    %v317 = vunpack.c.l.b16 %v59
    %v318 = vunpack.c.h.b16 %v59
    %v319 = vunpack.c.l.b16 %v60
    %v320 = vunpack.c.h.b16 %v60
    %v321 = vunpack.c.l.b16 %v61
    %v322 = vunpack.c.h.b16 %v61
    %v323 = vunpack.c.l.b16 %v62
    %v324 = vunpack.c.h.b16 %v62
    %v325 = vunpack.c.l.b16 %v63
    %v326 = vunpack.c.h.b16 %v63
    %v327 = vunpack.c.l.b16 %v64
    %v328 = vunpack.c.h.b16 %v64
    %v329 = vunpack.c.l.b16 %v65
    %v330 = vunpack.c.h.b16 %v65
    %v331 = vunpack.c.l.b16 %v66
    %v332 = vunpack.c.h.b16 %v66
    %v333 = vunpack.c.l.b16 %v67
    %v334 = vunpack.c.h.b16 %v67
    %v335 = vunpack.c.l.b16 %v68
    %v336 = vunpack.c.h.b16 %v68
    %v337 = vunpack.c.l.b16 %v69
    %v338 = vunpack.c.h.b16 %v69
    %v339 = vunpack.c.l.b16 %v70
    %v340 = vunpack.c.h.b16 %v70
    %v341 = vunpack.c.l.b16 %v71
    %v342 = vunpack.c.h.b16 %v71
    %v343 = vunpack.c.l.b16 %v72
    %v344 = vunpack.c.h.b16 %v72
    %v345 = vunpack.c.l.b16 %v73
    %v346 = vunpack.c.h.b16 %v73
    %v347 = vunpack.c.l.b16 %v74
    %v348 = vunpack.c.h.b16 %v74
    %v349 = vunpack.c.l.b16 %v75
    %v350 = vunpack.c.h.b16 %v75
    %v351 = vunpack.c.l.b16 %v76
    %v352 = vunpack.c.h.b16 %v76
    %v353 = vunpack.c.l.b16 %v77
    %v354 = vunpack.c.h.b16 %v77
    %v355 = vunpack.c.l.b16 %v78
    %v356 = vunpack.c.h.b16 %v78
    %v357 = vunpack.c.l.b16 %v79
    %v358 = vunpack.c.h.b16 %v79
    %v359 = vunpack.c.l.b16 %v80
    %v360 = vunpack.c.h.b16 %v80
    %v361 = vunpack.c.l.b16 %v81
    %v362 = vunpack.c.h.b16 %v81
    %v363 = vunpack.c.l.b16 %v82
    %v364 = vunpack.c.h.b16 %v82
    %v365 = vunpack.c.l.b16 %v83
    %v366 = vunpack.c.h.b16 %v83
    %v367 = vunpack.c.l.b16 %v84
    %v368 = vunpack.c.h.b16 %v84
    %v369 = vunpack.c.l.b16 %v85
    %v370 = vunpack.c.h.b16 %v85
    %v371 = vunpack.c.l.b16 %v86
    %v372 = vunpack.c.h.b16 %v86
    %v373 = vunpack.c.l.b16 %v87
    %v374 = vunpack.c.h.b16 %v87
    %v375 = vunpack.c.l.b16 %v88
    %v376 = vunpack.c.h.b16 %v88
    %v377 = vunpack.c.l.b16 %v89
    %v378 = vunpack.c.h.b16 %v89
    %v379 = vunpack.c.l.b16 %v90
    %v380 = vunpack.c.h.b16 %v90
    %v381 = vunpack.c.l.b16 %v91
    %v382 = vunpack.c.h.b16 %v91
    %v383 = vunpack.c.l.b16 %v92
    %v384 = vunpack.c.h.b16 %v92
    %v385 = vunpack.c.l.b16 %v93
    %v386 = vunpack.c.h.b16 %v93
    %v387 = vunpack.c.l.b16 %v94
    %v388 = vunpack.c.h.b16 %v94
    %v389 = vunpack.c.l.b16 %v95
    %v390 = vunpack.c.h.b16 %v95
    %v391 = vunpack.c.l.b16 %v96
    %v392 = vunpack.c.h.b16 %v96
    %v393 = vunpack.c.l.b16 %v97
    %v394 = vunpack.c.h.b16 %v97
    %v395 = vunpack.c.l.b16 %v98
    %v396 = vunpack.c.h.b16 %v98
    %v397 = vunpack.c.l.b16 %v99
    %v398 = vunpack.c.h.b16 %v99
    %v399 = vunpack.c.l.b16 %v100
    %v400 = vunpack.c.h.b16 %v100
    %v401 = vunpack.c.l.b16 %v101
    %v402 = vunpack.c.h.b16 %v101
    %v403 = vunpack.c.l.b16 %v102
    %v404 = vunpack.c.h.b16 %v102
    %v405 = vunpack.c.l.b16 %v103
    %v406 = vunpack.c.h.b16 %v103
    %v407 = vunpack.c.l.b16 %v104
    %v408 = vunpack.c.h.b16 %v104
    %v409 = vunpack.c.l.b16 %v105
    %v410 = vunpack.c.h.b16 %v105
    %v411 = vunpack.c.l.b16 %v106
    %v412 = vunpack.c.h.b16 %v106
    %v413 = vunpack.c.l.b16 %v107
    %v414 = vunpack.c.h.b16 %v107
    %v415 = vunpack.c.l.b16 %v108
    %v416 = vunpack.c.h.b16 %v108
    %v417 = vunpack.c.l.b16 %v109
    %v418 = vunpack.c.h.b16 %v109
    %v419 = vunpack.c.l.b16 %v110
    %v420 = vunpack.c.h.b16 %v110
    %v421 = vunpack.c.l.b16 %v111
    %v422 = vunpack.c.h.b16 %v111
    %v423 = vunpack.c.l.b16 %v112
    %v424 = vunpack.c.h.b16 %v112
    %v425 = vunpack.c.l.b16 %v113
    %v426 = vunpack.c.h.b16 %v113
    %v427 = vunpack.c.l.b16 %v114
    %v428 = vunpack.c.h.b16 %v114
    %v429 = vunpack.c.l.b16 %v115
    %v430 = vunpack.c.h.b16 %v115
    %v431 = vunpack.c.l.b16 %v116
    %v432 = vunpack.c.h.b16 %v116
    %v433 = vunpack.c.l.b16 %v117
    %v434 = vunpack.c.h.b16 %v117
    %v435 = vunpack.c.l.b16 %v118
    %v436 = vunpack.c.h.b16 %v118
    %v437 = vunpack.c.l.b16 %v119
    %v438 = vunpack.c.h.b16 %v119
    %v439 = vunpack.c.l.b16 %v120
    %v440 = vunpack.c.h.b16 %v120
    %v441 = vunpack.c.l.b16 %v121
    %v442 = vunpack.c.h.b16 %v121
    %v443 = vunpack.c.l.b16 %v122
    %v444 = vunpack.c.h.b16 %v122
    %v445 = vunpack.c.l.b16 %v123
    %v446 = vunpack.c.h.b16 %v123
    %v447 = vunpack.c.l.b16 %v124
    %v448 = vunpack.c.h.b16 %v124
    %v449 = vunpack.c.l.b16 %v125
    %v450 = vunpack.c.h.b16 %v125
    %v451 = vunpack.c.l.b16 %v126
    %v452 = vunpack.c.h.b16 %v126
    %v453 = vunpack.c.l.b16 %v127
    %v454 = vunpack.c.h.b16 %v127
    %v455 = vunpack.c.l.b16 %v128
    %v456 = vunpack.c.h.b16 %v128
    %v457 = vunpack.c.l.b16 %v129
    %v458 = vunpack.c.h.b16 %v129
    %v459 = vunpack.c.l.b16 %v130
    %v460 = vunpack.c.h.b16 %v130
    %v461 = vunpack.c.l.b16 %v131
    %v462 = vunpack.c.h.b16 %v131
    %v463 = vunpack.c.l.b16 %v132
    %v464 = vunpack.c.h.b16 %v132
    %v465 = vunpack.c.l.b16 %v133
    %v466 = vunpack.c.h.b16 %v133
    %v467 = vunpack.c.l.b16 %v134
    %v468 = vunpack.c.h.b16 %v134
    %v469 = vunpack.c.l.b16 %v135
    %v470 = vunpack.c.h.b16 %v135
    %v471 = vunpack.c.l.b16 %v136
    %v472 = vunpack.c.h.b16 %v136
    %v473 = vunpack.c.l.b16 %v137
    %v474 = vunpack.c.h.b16 %v137
    %v475 = vunpack.c.l.b16 %v138
    %v476 = vunpack.c.h.b16 %v138
    %v477 = vunpack.c.l.b16 %v139
    %v478 = vunpack.c.h.b16 %v139
    %v479 = vunpack.c.l.b16 %v140
    %v480 = vunpack.c.h.b16 %v140
    %v481 = vunpack.c.l.b16 %v141
    %v482 = vunpack.c.h.b16 %v141
    %v483 = vunpack.c.l.b16 %v142
    %v484 = vunpack.c.h.b16 %v142
    %v485 = vunpack.c.l.b16 %v143
    %v486 = vunpack.c.h.b16 %v143
    %v487 = vunpack.c.l.b16 %v144
    %v488 = vunpack.c.h.b16 %v144
    %v489 = vunpack.c.l.b16 %v145
    %v490 = vunpack.c.h.b16 %v145
    %v491 = vunpack.c.l.b16 %v146
    %v492 = vunpack.c.h.b16 %v146
    %v493 = vunpack.c.l.b16 %v147
    %v494 = vunpack.c.h.b16 %v147
    %v495 = vunpack.c.l.b16 %v148
    %v496 = vunpack.c.h.b16 %v148
    %v497 = vunpack.c.l.b16 %v149
    %v498 = vunpack.c.h.b16 %v149
    %v499 = vunpack.c.l.b16 %v150
    %v500 = vunpack.c.h.b16 %v150
    %v501 = vunpack.c.l.b16 %v151
    %v502 = vunpack.c.h.b16 %v151
    %v503 = vunpack.c.l.b16 %v152
    %v504 = vunpack.c.h.b16 %v152
    %v505 = vunpack.c.l.b16 %v153
    %v506 = vunpack.c.h.b16 %v153
    %v507 = vunpack.c.l.b16 %v154
    %v508 = vunpack.c.h.b16 %v154
    %v509 = vunpack.c.l.b16 %v155
    %v510 = vunpack.c.h.b16 %v155
    %v511 = vunpack.c.l.b16 %v156
    %v512 = vunpack.c.h.b16 %v156
    %v513 = vunpack.c.l.b16 %v157
    %v514 = vunpack.c.h.b16 %v157
    %v515 = vunpack.c.l.b16 %v158
    %v516 = vunpack.c.h.b16 %v158
    %v517 = vunpack.c.l.b16 %v159
    %v518 = vunpack.c.h.b16 %v159
    %v519 = vunpack.c.l.b16 %v160
    %v520 = vunpack.c.h.b16 %v160
    %v521 = vunpack.c.l.b16 %v161
    %v522 = vunpack.c.h.b16 %v161
    %v523 = vunpack.c.l.b16 %v162
    %v524 = vunpack.c.h.b16 %v162
    %v525 = vunpack.c.l.b16 %v163
    %v526 = vunpack.c.h.b16 %v163
    %v527 = vunpack.c.l.b16 %v164
    %v528 = vunpack.c.h.b16 %v164
    %v529 = vunpack.c.l.b16 %v165
    %v530 = vunpack.c.h.b16 %v165
    %v531 = vunpack.c.l.b16 %v166
    %v532 = vunpack.c.h.b16 %v166
    %v533 = vunpack.c.l.b16 %v167
    %v534 = vunpack.c.h.b16 %v167
    %v535 = vunpack.c.l.b16 %v168
    %v536 = vunpack.c.h.b16 %v168
    %v537 = vunpack.c.l.b16 %v169
    %v538 = vunpack.c.h.b16 %v169
    %v539 = vunpack.c.l.b16 %v170
    %v540 = vunpack.c.h.b16 %v170
    %v541 = vunpack.c.l.b16 %v171
    %v542 = vunpack.c.h.b16 %v171
    %v543 = vunpack.c.l.b16 %v172
    %v544 = vunpack.c.h.b16 %v172
    %v545 = vunpack.c.l.b16 %v173
    %v546 = vunpack.c.h.b16 %v173
    %v547 = vunpack.c.l.b16 %v174
    %v548 = vunpack.c.h.b16 %v174
    %v549 = vunpack.c.l.b16 %v175
    %v550 = vunpack.c.h.b16 %v175
    %v551 = vunpack.c.l.b16 %v176
    %v552 = vunpack.c.h.b16 %v176
    %v553 = vunpack.c.l.b16 %v177
    %v554 = vunpack.c.h.b16 %v177
    %v555 = vunpack.c.l.b16 %v178
    %v556 = vunpack.c.h.b16 %v178
    %v557 = vunpack.c.l.b16 %v179
    %v558 = vunpack.c.h.b16 %v179
    %v559 = vunpack.c.l.b16 %v180
    %v560 = vunpack.c.h.b16 %v180
    %v561 = vunpack.c.l.b16 %v181
    %v562 = vunpack.c.h.b16 %v181
    %v563 = vunpack.c.l.b16 %v182
    %v564 = vunpack.c.h.b16 %v182
    %v565 = vunpack.c.l.b16 %v183
    %v566 = vunpack.c.h.b16 %v183
    %v567 = vunpack.c.l.b16 %v184
    %v568 = vunpack.c.h.b16 %v184
    %v569 = vpack.c.b16 %v321, %v313
    %v570 = vpack.c.b16 %v322, %v314
    %v571 = vpack.c.b16 %v323, %v315
    %v572 = vpack.c.b16 %v324, %v316
    %v573 = vpack.c.b16 %v325, %v317
    %v574 = vpack.c.b16 %v326, %v318
    %v575 = vpack.c.b16 %v327, %v319
    %v576 = vpack.c.b16 %v328, %v320
    %v577 = vpack.c.b16 %v337, %v329
    %v578 = vpack.c.b16 %v338, %v330
    %v579 = vpack.c.b16 %v339, %v331
    %v580 = vpack.c.b16 %v340, %v332
    %v581 = vpack.c.b16 %v341, %v333
    %v582 = vpack.c.b16 %v342, %v334
    %v583 = vpack.c.b16 %v343, %v335
    %v584 = vpack.c.b16 %v344, %v336
    %v585 = vpack.c.b16 %v353, %v345
    %v586 = vpack.c.b16 %v354, %v346
    %v587 = vpack.c.b16 %v355, %v347
    %v588 = vpack.c.b16 %v356, %v348
    %v589 = vpack.c.b16 %v357, %v349
    %v590 = vpack.c.b16 %v358, %v350
    %v591 = vpack.c.b16 %v359, %v351
    %v592 = vpack.c.b16 %v360, %v352
    %v593 = vpack.c.b16 %v369, %v361
    %v594 = vpack.c.b16 %v370, %v362
    %v595 = vpack.c.b16 %v371, %v363
    %v596 = vpack.c.b16 %v372, %v364
    %v597 = vpack.c.b16 %v373, %v365
    %v598 = vpack.c.b16 %v374, %v366
    %v599 = vpack.c.b16 %v375, %v367
    %v600 = vpack.c.b16 %v376, %v368
    %v601 = vpack.c.b16 %v385, %v377
    %v602 = vpack.c.b16 %v386, %v378
    %v603 = vpack.c.b16 %v387, %v379
    %v604 = vpack.c.b16 %v388, %v380
    %v605 = vpack.c.b16 %v389, %v381
    %v606 = vpack.c.b16 %v390, %v382
    %v607 = vpack.c.b16 %v391, %v383
    %v608 = vpack.c.b16 %v392, %v384
    %v609 = vpack.c.b16 %v401, %v393
    %v610 = vpack.c.b16 %v402, %v394
    %v611 = vpack.c.b16 %v403, %v395
    %v612 = vpack.c.b16 %v404, %v396
    %v613 = vpack.c.b16 %v405, %v397
    %v614 = vpack.c.b16 %v406, %v398
    %v615 = vpack.c.b16 %v407, %v399
    %v616 = vpack.c.b16 %v408, %v400
    %v617 = vpack.c.b16 %v417, %v409
    %v618 = vpack.c.b16 %v418, %v410
    %v619 = vpack.c.b16 %v419, %v411
    %v620 = vpack.c.b16 %v420, %v412
    %v621 = vpack.c.b16 %v421, %v413
    %v622 = vpack.c.b16 %v422, %v414
    %v623 = vpack.c.b16 %v423, %v415
    %v624 = vpack.c.b16 %v424, %v416
    %v625 = vpack.c.b16 %v433, %v425
    %v626 = vpack.c.b16 %v434, %v426
    %v627 = vpack.c.b16 %v435, %v427
    %v628 = vpack.c.b16 %v436, %v428
    %v629 = vpack.c.b16 %v437, %v429
    %v630 = vpack.c.b16 %v438, %v430
    %v631 = vpack.c.b16 %v439, %v431
    %v632 = vpack.c.b16 %v440, %v432
    %v633 = vpack.c.b16 %v449, %v441
    %v634 = vpack.c.b16 %v450, %v442
    %v635 = vpack.c.b16 %v451, %v443
    %v636 = vpack.c.b16 %v452, %v444
    %v637 = vpack.c.b16 %v453, %v445
    %v638 = vpack.c.b16 %v454, %v446
    %v639 = vpack.c.b16 %v455, %v447
    %v640 = vpack.c.b16 %v456, %v448
    %v641 = vpack.c.b16 %v465, %v457
    %v642 = vpack.c.b16 %v466, %v458
    %v643 = vpack.c.b16 %v467, %v459
    %v644 = vpack.c.b16 %v468, %v460
    %v645 = vpack.c.b16 %v469, %v461
    %v646 = vpack.c.b16 %v470, %v462
    %v647 = vpack.c.b16 %v471, %v463
    %v648 = vpack.c.b16 %v472, %v464
    %v649 = vpack.c.b16 %v481, %v473
    %v650 = vpack.c.b16 %v482, %v474
    %v651 = vpack.c.b16 %v483, %v475
    %v652 = vpack.c.b16 %v484, %v476
    %v653 = vpack.c.b16 %v485, %v477
    %v654 = vpack.c.b16 %v486, %v478
    %v655 = vpack.c.b16 %v487, %v479
    %v656 = vpack.c.b16 %v488, %v480
    %v657 = vpack.c.b16 %v497, %v489
    %v658 = vpack.c.b16 %v498, %v490
    %v659 = vpack.c.b16 %v499, %v491
    %v660 = vpack.c.b16 %v500, %v492
    %v661 = vpack.c.b16 %v501, %v493
    %v662 = vpack.c.b16 %v502, %v494
    %v663 = vpack.c.b16 %v503, %v495
    %v664 = vpack.c.b16 %v504, %v496
    %v665 = vpack.c.b16 %v513, %v505
    %v666 = vpack.c.b16 %v514, %v506
    %v667 = vpack.c.b16 %v515, %v507
    %v668 = vpack.c.b16 %v516, %v508
    %v669 = vpack.c.b16 %v517, %v509
    %v670 = vpack.c.b16 %v518, %v510
    %v671 = vpack.c.b16 %v519, %v511
    %v672 = vpack.c.b16 %v520, %v512
    %v673 = vpack.c.b16 %v529, %v521
    %v674 = vpack.c.b16 %v530, %v522
    %v675 = vpack.c.b16 %v531, %v523
    %v676 = vpack.c.b16 %v532, %v524
    %v677 = vpack.c.b16 %v533, %v525
    %v678 = vpack.c.b16 %v534, %v526
    %v679 = vpack.c.b16 %v535, %v527
    %v680 = vpack.c.b16 %v536, %v528
    %v681 = vpack.c.b16 %v545, %v537
    %v682 = vpack.c.b16 %v546, %v538
    %v683 = vpack.c.b16 %v547, %v539
    %v684 = vpack.c.b16 %v548, %v540
    %v685 = vpack.c.b16 %v549, %v541
    %v686 = vpack.c.b16 %v550, %v542
    %v687 = vpack.c.b16 %v551, %v543
    %v688 = vpack.c.b16 %v552, %v544
    %v689 = vpack.c.b16 %v561, %v553
    %v690 = vpack.c.b16 %v562, %v554
    %v691 = vpack.c.b16 %v563, %v555
    %v692 = vpack.c.b16 %v564, %v556
    %v693 = vpack.c.b16 %v565, %v557
    %v694 = vpack.c.b16 %v566, %v558
    %v695 = vpack.c.b16 %v567, %v559
    %v696 = vpack.c.b16 %v568, %v560
    %825 = vmatpush.bf16.msra.mxu0 %v625
    %826 = vmatpush.bf16.msra.mxu0 %v617
    %827 = vmatpush.bf16.msra.mxu0 %v609
    %828 = vmatpush.bf16.msra.mxu0 %v601
    %829 = vmatpush.bf16.msra.mxu0 %v593
    %830 = vmatpush.bf16.msra.mxu0 %v585
    %831 = vmatpush.bf16.msra.mxu0 %v577
    %832 = vmatpush.bf16.msra.mxu0 %v569
    %833 = vmatmul.bf16.gmra.mxu0 %v53
    %v834 = vpop.f32.mrf.mxu0
    %v835 = vadd.f32 0.0, %v834
    %v836 = vpop.f32.mrf.mxu0
    %v837 = vadd.f32 0.0, %v836
    %838 = vmatmul.bf16.gmra.mxu0 %v55
    %v839 = vpop.f32.mrf.mxu0
    %v840 = vadd.f32 0.0, %v839
    %v841 = vpop.f32.mrf.mxu0
    %v842 = vadd.f32 0.0, %v841
    %843 = vdwg.mxu0
    %844 = vmatpush.bf16.msra.mxu0 %v689
    %845 = vmatpush.bf16.msra.mxu0 %v681
    %846 = vmatpush.bf16.msra.mxu0 %v673
    %847 = vmatpush.bf16.msra.mxu0 %v665
    %848 = vmatpush.bf16.msra.mxu0 %v657
    %849 = vmatpush.bf16.msra.mxu0 %v649
    %850 = vmatpush.bf16.msra.mxu0 %v641
    %851 = vmatpush.bf16.msra.mxu0 %v633
    %852 = vmatmul.bf16.gmra.mxu0 %v54
    %v853 = vpop.f32.mrf.mxu0
    %v854 = vadd.f32 %v835, %v853
    %v855 = vpop.f32.mrf.mxu0
    %v856 = vadd.f32 %v837, %v855
    %857 = vmatmul.bf16.gmra.mxu0 %v56
    %v858 = vpop.f32.mrf.mxu0
    %v859 = vadd.f32 %v840, %v858
    %v860 = vpop.f32.mrf.mxu0
    %v861 = vadd.f32 %v842, %v860
    %862 = vdwg.mxu0
    %863 = vmatpush.bf16.msra.mxu0 %v626
    %864 = vmatpush.bf16.msra.mxu0 %v618
    %865 = vmatpush.bf16.msra.mxu0 %v610
    %866 = vmatpush.bf16.msra.mxu0 %v602
    %867 = vmatpush.bf16.msra.mxu0 %v594
    %868 = vmatpush.bf16.msra.mxu0 %v586
    %869 = vmatpush.bf16.msra.mxu0 %v578
    %870 = vmatpush.bf16.msra.mxu0 %v570
    %871 = vmatmul.bf16.gmra.mxu0 %v53
    %v872 = vpop.f32.mrf.mxu0
    %v873 = vadd.f32 0.0, %v872
    %v874 = vpop.f32.mrf.mxu0
    %v875 = vadd.f32 0.0, %v874
    %876 = vmatmul.bf16.gmra.mxu0 %v55
    %v877 = vpop.f32.mrf.mxu0
    %v878 = vadd.f32 0.0, %v877
    %v879 = vpop.f32.mrf.mxu0
    %v880 = vadd.f32 0.0, %v879
    %881 = vdwg.mxu0
    %882 = vmatpush.bf16.msra.mxu0 %v690
    %883 = vmatpush.bf16.msra.mxu0 %v682
    %884 = vmatpush.bf16.msra.mxu0 %v674
    %885 = vmatpush.bf16.msra.mxu0 %v666
    %886 = vmatpush.bf16.msra.mxu0 %v658
    %887 = vmatpush.bf16.msra.mxu0 %v650
    %888 = vmatpush.bf16.msra.mxu0 %v642
    %889 = vmatpush.bf16.msra.mxu0 %v634
    %890 = vmatmul.bf16.gmra.mxu0 %v54
    %v891 = vpop.f32.mrf.mxu0
    %v892 = vadd.f32 %v873, %v891
    %v893 = vpop.f32.mrf.mxu0
    %v894 = vadd.f32 %v875, %v893
    %895 = vmatmul.bf16.gmra.mxu0 %v56
    %v896 = vpop.f32.mrf.mxu0
    %v897 = vadd.f32 %v878, %v896
    %v898 = vpop.f32.mrf.mxu0
    %v899 = vadd.f32 %v880, %v898
    %900 = vdwg.mxu0
    %901 = vmatpush.bf16.msra.mxu0 %v627
    %902 = vmatpush.bf16.msra.mxu0 %v619
    %903 = vmatpush.bf16.msra.mxu0 %v611
    %904 = vmatpush.bf16.msra.mxu0 %v603
    %905 = vmatpush.bf16.msra.mxu0 %v595
    %906 = vmatpush.bf16.msra.mxu0 %v587
    %907 = vmatpush.bf16.msra.mxu0 %v579
    %908 = vmatpush.bf16.msra.mxu0 %v571
    %909 = vmatmul.bf16.gmra.mxu0 %v53
    %v910 = vpop.f32.mrf.mxu0
    %v911 = vadd.f32 0.0, %v910
    %v912 = vpop.f32.mrf.mxu0
    %v913 = vadd.f32 0.0, %v912
    %914 = vmatmul.bf16.gmra.mxu0 %v55
    %v915 = vpop.f32.mrf.mxu0
    %v916 = vadd.f32 0.0, %v915
    %v917 = vpop.f32.mrf.mxu0
    %v918 = vadd.f32 0.0, %v917
    %919 = vdwg.mxu0
    %920 = vmatpush.bf16.msra.mxu0 %v691
    %921 = vmatpush.bf16.msra.mxu0 %v683
    %922 = vmatpush.bf16.msra.mxu0 %v675
    %923 = vmatpush.bf16.msra.mxu0 %v667
    %924 = vmatpush.bf16.msra.mxu0 %v659
    %925 = vmatpush.bf16.msra.mxu0 %v651
    %926 = vmatpush.bf16.msra.mxu0 %v643
    %927 = vmatpush.bf16.msra.mxu0 %v635
    %928 = vmatmul.bf16.gmra.mxu0 %v54
    %v929 = vpop.f32.mrf.mxu0
    %v930 = vadd.f32 %v911, %v929
    %v931 = vpop.f32.mrf.mxu0
    %v932 = vadd.f32 %v913, %v931
    %933 = vmatmul.bf16.gmra.mxu0 %v56
    %v934 = vpop.f32.mrf.mxu0
    %v935 = vadd.f32 %v916, %v934
    %v936 = vpop.f32.mrf.mxu0
    %v937 = vadd.f32 %v918, %v936
    %938 = vdwg.mxu0
    %939 = vmatpush.bf16.msra.mxu0 %v628
    %940 = vmatpush.bf16.msra.mxu0 %v620
    %941 = vmatpush.bf16.msra.mxu0 %v612
    %942 = vmatpush.bf16.msra.mxu0 %v604
    %943 = vmatpush.bf16.msra.mxu0 %v596
    %944 = vmatpush.bf16.msra.mxu0 %v588
    %945 = vmatpush.bf16.msra.mxu0 %v580
    %946 = vmatpush.bf16.msra.mxu0 %v572
    %947 = vmatmul.bf16.gmra.mxu0 %v53
    %v948 = vpop.f32.mrf.mxu0
    %v949 = vadd.f32 0.0, %v948
    %v950 = vpop.f32.mrf.mxu0
    %v951 = vadd.f32 0.0, %v950
    %952 = vmatmul.bf16.gmra.mxu0 %v55
    %v953 = vpop.f32.mrf.mxu0
    %v954 = vadd.f32 0.0, %v953
    %v955 = vpop.f32.mrf.mxu0
    %v956 = vadd.f32 0.0, %v955
    %957 = vdwg.mxu0
    %958 = vmatpush.bf16.msra.mxu0 %v692
    %959 = vmatpush.bf16.msra.mxu0 %v684
    %960 = vmatpush.bf16.msra.mxu0 %v676
    %961 = vmatpush.bf16.msra.mxu0 %v668
    %962 = vmatpush.bf16.msra.mxu0 %v660
    %963 = vmatpush.bf16.msra.mxu0 %v652
    %964 = vmatpush.bf16.msra.mxu0 %v644
    %965 = vmatpush.bf16.msra.mxu0 %v636
    %966 = vmatmul.bf16.gmra.mxu0 %v54
    %v967 = vpop.f32.mrf.mxu0
    %v968 = vadd.f32 %v949, %v967
    %v969 = vpop.f32.mrf.mxu0
    %v970 = vadd.f32 %v951, %v969
    %971 = vmatmul.bf16.gmra.mxu0 %v56
    %v972 = vpop.f32.mrf.mxu0
    %v973 = vadd.f32 %v954, %v972
    %v974 = vpop.f32.mrf.mxu0
    %v975 = vadd.f32 %v956, %v974
    %976 = vdwg.mxu0
    %977 = vmatpush.bf16.msra.mxu0 %v629
    %978 = vmatpush.bf16.msra.mxu0 %v621
    %979 = vmatpush.bf16.msra.mxu0 %v613
    %980 = vmatpush.bf16.msra.mxu0 %v605
    %981 = vmatpush.bf16.msra.mxu0 %v597
    %982 = vmatpush.bf16.msra.mxu0 %v589
    %983 = vmatpush.bf16.msra.mxu0 %v581
    %984 = vmatpush.bf16.msra.mxu0 %v573
    %985 = vmatmul.bf16.gmra.mxu0 %v53
    %v986 = vpop.f32.mrf.mxu0
    %v987 = vadd.f32 0.0, %v986
    %v988 = vpop.f32.mrf.mxu0
    %v989 = vadd.f32 0.0, %v988
    %990 = vmatmul.bf16.gmra.mxu0 %v55
    %v991 = vpop.f32.mrf.mxu0
    %v992 = vadd.f32 0.0, %v991
    %v993 = vpop.f32.mrf.mxu0
    %v994 = vadd.f32 0.0, %v993
    %995 = vdwg.mxu0
    %996 = vmatpush.bf16.msra.mxu0 %v693
    %997 = vmatpush.bf16.msra.mxu0 %v685
    %998 = vmatpush.bf16.msra.mxu0 %v677
    %999 = vmatpush.bf16.msra.mxu0 %v669
    %1000 = vmatpush.bf16.msra.mxu0 %v661
    %1001 = vmatpush.bf16.msra.mxu0 %v653
    %1002 = vmatpush.bf16.msra.mxu0 %v645
    %1003 = vmatpush.bf16.msra.mxu0 %v637
    %1004 = vmatmul.bf16.gmra.mxu0 %v54
    %v1005 = vpop.f32.mrf.mxu0
    %v1006 = vadd.f32 %v987, %v1005
    %v1007 = vpop.f32.mrf.mxu0
    %v1008 = vadd.f32 %v989, %v1007
    %1009 = vmatmul.bf16.gmra.mxu0 %v56
    %v1010 = vpop.f32.mrf.mxu0
    %v1011 = vadd.f32 %v992, %v1010
    %v1012 = vpop.f32.mrf.mxu0
    %v1013 = vadd.f32 %v994, %v1012
    %1014 = vdwg.mxu0
    %1015 = vmatpush.bf16.msra.mxu0 %v630
    %1016 = vmatpush.bf16.msra.mxu0 %v622
    %1017 = vmatpush.bf16.msra.mxu0 %v614
    %1018 = vmatpush.bf16.msra.mxu0 %v606
    %1019 = vmatpush.bf16.msra.mxu0 %v598
    %1020 = vmatpush.bf16.msra.mxu0 %v590
    %1021 = vmatpush.bf16.msra.mxu0 %v582
    %1022 = vmatpush.bf16.msra.mxu0 %v574
    %1023 = vmatmul.bf16.gmra.mxu0 %v53
    %v1024 = vpop.f32.mrf.mxu0
    %v1025 = vadd.f32 0.0, %v1024
    %v1026 = vpop.f32.mrf.mxu0
    %v1027 = vadd.f32 0.0, %v1026
    %1028 = vmatmul.bf16.gmra.mxu0 %v55
    %v1029 = vpop.f32.mrf.mxu0
    %v1030 = vadd.f32 0.0, %v1029
    %v1031 = vpop.f32.mrf.mxu0
    %v1032 = vadd.f32 0.0, %v1031
    %1033 = vdwg.mxu0
    %1034 = vmatpush.bf16.msra.mxu0 %v694
    %1035 = vmatpush.bf16.msra.mxu0 %v686
    %1036 = vmatpush.bf16.msra.mxu0 %v678
    %1037 = vmatpush.bf16.msra.mxu0 %v670
    %1038 = vmatpush.bf16.msra.mxu0 %v662
    %1039 = vmatpush.bf16.msra.mxu0 %v654
    %1040 = vmatpush.bf16.msra.mxu0 %v646
    %1041 = vmatpush.bf16.msra.mxu0 %v638
    %1042 = vmatmul.bf16.gmra.mxu0 %v54
    %v1043 = vpop.f32.mrf.mxu0
    %v1044 = vadd.f32 %v1025, %v1043
    %v1045 = vpop.f32.mrf.mxu0
    %v1046 = vadd.f32 %v1027, %v1045
    %1047 = vmatmul.bf16.gmra.mxu0 %v56
    %v1048 = vpop.f32.mrf.mxu0
    %v1049 = vadd.f32 %v1030, %v1048
    %v1050 = vpop.f32.mrf.mxu0
    %v1051 = vadd.f32 %v1032, %v1050
    %1052 = vdwg.mxu0
    %1053 = vmatpush.bf16.msra.mxu0 %v631
    %1054 = vmatpush.bf16.msra.mxu0 %v623
    %1055 = vmatpush.bf16.msra.mxu0 %v615
    %1056 = vmatpush.bf16.msra.mxu0 %v607
    %1057 = vmatpush.bf16.msra.mxu0 %v599
    %1058 = vmatpush.bf16.msra.mxu0 %v591
    %1059 = vmatpush.bf16.msra.mxu0 %v583
    %1060 = vmatpush.bf16.msra.mxu0 %v575
    %1061 = vmatmul.bf16.gmra.mxu0 %v53
    %v1062 = vpop.f32.mrf.mxu0
    %v1063 = vadd.f32 0.0, %v1062
    %v1064 = vpop.f32.mrf.mxu0
    %v1065 = vadd.f32 0.0, %v1064
    %1066 = vmatmul.bf16.gmra.mxu0 %v55
    %v1067 = vpop.f32.mrf.mxu0
    %v1068 = vadd.f32 0.0, %v1067
    %v1069 = vpop.f32.mrf.mxu0
    %v1070 = vadd.f32 0.0, %v1069
    %1071 = vdwg.mxu0
    %1072 = vmatpush.bf16.msra.mxu0 %v695
    %1073 = vmatpush.bf16.msra.mxu0 %v687
    %1074 = vmatpush.bf16.msra.mxu0 %v679
    %1075 = vmatpush.bf16.msra.mxu0 %v671
    %1076 = vmatpush.bf16.msra.mxu0 %v663
    %1077 = vmatpush.bf16.msra.mxu0 %v655
    %1078 = vmatpush.bf16.msra.mxu0 %v647
    %1079 = vmatpush.bf16.msra.mxu0 %v639
    %1080 = vmatmul.bf16.gmra.mxu0 %v54
    %v1081 = vpop.f32.mrf.mxu0
    %v1082 = vadd.f32 %v1063, %v1081
    %v1083 = vpop.f32.mrf.mxu0
    %v1084 = vadd.f32 %v1065, %v1083
    %1085 = vmatmul.bf16.gmra.mxu0 %v56
    %v1086 = vpop.f32.mrf.mxu0
    %v1087 = vadd.f32 %v1068, %v1086
    %v1088 = vpop.f32.mrf.mxu0
    %v1089 = vadd.f32 %v1070, %v1088
    %1090 = vdwg.mxu0
    %1091 = vmatpush.bf16.msra.mxu0 %v632
    %1092 = vmatpush.bf16.msra.mxu0 %v624
    %1093 = vmatpush.bf16.msra.mxu0 %v616
    %1094 = vmatpush.bf16.msra.mxu0 %v608
    %1095 = vmatpush.bf16.msra.mxu0 %v600
    %1096 = vmatpush.bf16.msra.mxu0 %v592
    %1097 = vmatpush.bf16.msra.mxu0 %v584
    %1098 = vmatpush.bf16.msra.mxu0 %v576
    %1099 = vmatmul.bf16.gmra.mxu0 %v53
    %v1100 = vpop.f32.mrf.mxu0
    %v1101 = vadd.f32 0.0, %v1100
    %v1102 = vpop.f32.mrf.mxu0
    %v1103 = vadd.f32 0.0, %v1102
    %1104 = vmatmul.bf16.gmra.mxu0 %v55
    %v1105 = vpop.f32.mrf.mxu0
    %v1106 = vadd.f32 0.0, %v1105
    %v1107 = vpop.f32.mrf.mxu0
    %v1108 = vadd.f32 0.0, %v1107
    %1109 = vdwg.mxu0
    %1110 = vmatpush.bf16.msra.mxu0 %v696
    %1111 = vmatpush.bf16.msra.mxu0 %v688
    %1112 = vmatpush.bf16.msra.mxu0 %v680
    %1113 = vmatpush.bf16.msra.mxu0 %v672
    %1114 = vmatpush.bf16.msra.mxu0 %v664
    %1115 = vmatpush.bf16.msra.mxu0 %v656
    %1116 = vmatpush.bf16.msra.mxu0 %v648
    %1117 = vmatpush.bf16.msra.mxu0 %v640
    %1118 = vmatmul.bf16.gmra.mxu0 %v54
    %v1119 = vpop.f32.mrf.mxu0
    %v1120 = vadd.f32 %v1101, %v1119
    %v1121 = vpop.f32.mrf.mxu0
    %v1122 = vadd.f32 %v1103, %v1121
    %1123 = vmatmul.bf16.gmra.mxu0 %v56
    %v1124 = vpop.f32.mrf.mxu0
    %v1125 = vadd.f32 %v1106, %v1124
    %v1126 = vpop.f32.mrf.mxu0
    %v1127 = vadd.f32 %v1108, %v1126
    %1128 = vdwg.mxu0
    %1129 = vst [vmem:[%s2] sm:$0xff] %v854
    %1130 = vst [vmem:[%s2 + $0x8] sm:$0xff] %v892
    %1131 = vst [vmem:[%s2 + $0x10] sm:$0xff] %v930
    %1132 = vst [vmem:[%s2 + $0x18] sm:$0xff] %v968
    %1133 = vst [vmem:[%s2 + $0x20] sm:$0xff] %v1006
    %1134 = vst [vmem:[%s2 + $0x28] sm:$0xff] %v1044
    %1135 = vst [vmem:[%s2 + $0x30] sm:$0xff] %v1082
    %1136 = vst [vmem:[%s2 + $0x38] sm:$0xff] %v1120
    %1137 = vst [vmem:[%s2 + $0x40] sm:$0xff] %v856
    %1138 = vst [vmem:[%s2 + $0x48] sm:$0xff] %v894
    %1139 = vst [vmem:[%s2 + $0x50] sm:$0xff] %v932
    %1140 = vst [vmem:[%s2 + $0x58] sm:$0xff] %v970
    %1141 = vst [vmem:[%s2 + $0x60] sm:$0xff] %v1008
    %1142 = vst [vmem:[%s2 + $0x68] sm:$0xff] %v1046
    %1143 = vst [vmem:[%s2 + $0x70] sm:$0xff] %v1084
    %1144 = vst [vmem:[%s2 + $0x78] sm:$0xff] %v1122
    %1145 = vst [vmem:[%s2 + $0x80] sm:$0xff] %v859
    %1146 = vst [vmem:[%s2 + $0x88] sm:$0xff] %v897
    %1147 = vst [vmem:[%s2 + $0x90] sm:$0xff] %v935
    %1148 = vst [vmem:[%s2 + $0x98] sm:$0xff] %v973
    %1149 = vst [vmem:[%s2 + $0xa0] sm:$0xff] %v1011
    %1150 = vst [vmem:[%s2 + $0xa8] sm:$0xff] %v1049
    %1151 = vst [vmem:[%s2 + $0xb0] sm:$0xff] %v1087
    %1152 = vst [vmem:[%s2 + $0xb8] sm:$0xff] %v1125
    %1153 = vst [vmem:[%s2 + $0xc0] sm:$0xff] %v861
    %1154 = vst [vmem:[%s2 + $0xc8] sm:$0xff] %v899
    %1155 = vst [vmem:[%s2 + $0xd0] sm:$0xff] %v937
    %1156 = vst [vmem:[%s2 + $0xd8] sm:$0xff] %v975
    %1157 = vst [vmem:[%s2 + $0xe0] sm:$0xff] %v1013
    %1158 = vst [vmem:[%s2 + $0xe8] sm:$0xff] %v1051
    %1159 = vst [vmem:[%s2 + $0xf0] sm:$0xff] %v1089
    %1160 = vst [vmem:[%s2 + $0xf8] sm:$0xff] %v1127
    // Predicated region
    $region14: #{preprocess.1} parent=1 // pred_check
      _
    $region15: #{preprocess.1} parent=1 // pred_check_branch
      %1162 = sbr.rel (0) target = $region17
    $region16: #{preprocess.1} parent=1 // pred_region
      _
    $region17: #{preprocess.1} parent=1 // pred_fallthru
      _
    // Predicated region
    $region18: #{preprocess.1} parent=1 // pred_check
      _
    $region19: #{preprocess.1} parent=1 // pred_check_branch
      %1164 = sbr.rel (0) target = $region21
    $region20: #{preprocess.1} parent=1 // pred_region
      _
    $region21: #{preprocess.1} parent=1 // pred_fallthru
      _
    %1165 = vsyncpa [#allocation3], 1

</llo_original>
